<compile_context>
chip_gen: v5e
topology: v5e:2x2
jax: 0.10.0
libtpu: 0.0.40
codegen_flags: <defaults>
</compile_context>

<pallas_src>
import functools

import jax
import jax.numpy as jnp
from jax.experimental import pallas as pl
from jax.experimental.pallas import tpu as pltpu


# ----------------------------- hardware queries ------------------------------


def _device_kind() -> str:
    try:
        return jax.devices()[0].device_kind.lower()
    except Exception:
        return ""


def _vmem_capacity_bytes() -> int:
    """Physical VMEM per TensorCore (used for generation-aware tiling)."""
    try:
        return int(pltpu.get_tpu_info().vmem_capacity_bytes)
    except Exception:
        pass
    kind = _device_kind()
    if "v7" in kind or "7x" in kind:
        return 64 << 20            # v7x: 64 MiB / TensorCore
    return 128 << 20               # v5e / v6e (and older): 128 MiB


def _default_compute_dtype(x_dtype):
    """bf16 compute for bf16 I/O on chips with a bf16 VPU (v6e/v7x), else f32."""
    if jnp.dtype(x_dtype) == jnp.dtype(jnp.bfloat16):
        kind = _device_kind()
        is_old = any(t in kind for t in ("v2", "v3", "v4", "v5"))
        if kind and not is_old:
            return jnp.dtype(jnp.bfloat16)
    return jnp.dtype(jnp.float32)


# --------------------------------- kernel ------------------------------------


def _spatial_gradient_kernel(x_ref, *o_refs, H: int, W: int, compute_dtype,
                             packed_out: bool):
    """x_ref: (Nb, H*W) flattened images.

    packed_out=True : o_refs = (o_ref,) with shape (Nb, 2*H*W) = [gx | gy]
    packed_out=False: o_refs = (gx_ref, gy_ref), each (Nb, H*W)
    """
    HW = H * W
    x = x_ref[...].astype(compute_dtype)                     # (Nb, HW)

    # Edge masks computed ONCE on a single (1, HW) lane row; the jnp.where's
    # below broadcast them across the Nb sublanes (cheap sublane broadcast),
    # so the iota / `% W` / compare chain is not paid per pixel.
    f = jax.lax.broadcasted_iota(jnp.int32, (1, HW), dimension=1)
    col = f % W
    is_top = f < W                                           # image row 0
    is_bot = f >= (H - 1) * W                                # image row H-1
    is_left = col == 0                                       # image col 0
    is_right = col == (W - 1)                                # image col W-1

    # Vertical pass: neighbors via lane rotation by +-W (replicate top/bottom).
    x_up = jnp.where(is_top, x, pltpu.roll(x, W % HW, 1))          # x[f - W]
    x_dn = jnp.where(is_bot, x, pltpu.roll(x, (HW - W) % HW, 1))   # x[f + W]
    s = x_up + 2.0 * x + x_dn                                # vertical smooth (gx)
    d = x_dn - x_up                                          # vertical diff   (gy)

    # Horizontal pass: neighbors via lane rotation by +-1 (replicate left/right).
    s_l = jnp.where(is_left, s, pltpu.roll(s, 1 % HW, 1))            # s[f - 1]
    s_r = jnp.where(is_right, s, pltpu.roll(s, (HW - 1) % HW, 1))    # s[f + 1]
    d_l = jnp.where(is_left, d, pltpu.roll(d, 1 % HW, 1))
    d_r = jnp.where(is_right, d, pltpu.roll(d, (HW - 1) % HW, 1))

    gx = s_r - s_l                                           # cross-corr with Kx
    gy = d_l + 2.0 * d + d_r                                 # cross-corr with Ky

    if packed_out:
        (o_ref,) = o_refs
        o_ref[:, 0:HW] = gx.astype(o_ref.dtype)              # lane offset 0
        o_ref[:, HW:2 * HW] = gy.astype(o_ref.dtype)         # lane offset HW (128-aligned)
    else:
        gx_ref, gy_ref = o_refs
        gx_ref[...] = gx.astype(gx_ref.dtype)
        gy_ref[...] = gy.astype(gy_ref.dtype)


# -------------------------------- wrapper -------------------------------------


def spatial_gradient(x: jax.Array, *, block_images: int | None = None,
                     compute_dtype=None) -> jax.Array:
    """kornia SpatialGradient (mode='sobel', order=1), unnormalized.

    x: (B, C, H, W). Returns (B, C, 2, H, W); [:, :, 0] = d/dx, [:, :, 1] = d/dy.
    """
    B, C, H, W = x.shape
    N = B * C
    HW = H * W
    itemsize = jnp.dtype(x.dtype).itemsize
    if compute_dtype is None:
        compute_dtype = _default_compute_dtype(x.dtype)
    compute_dtype = jnp.dtype(compute_dtype)
    packed_out = (HW % 128 == 0)

    # Generation-aware block size / VMEM budget.
    vmem_cap = _vmem_capacity_bytes()
    if vmem_cap >= (100 << 20):          # v5e / v6e: 128 MiB physical VMEM
        target_in_bytes = 4 << 20        # ~4 MiB input blocks (~12 MiB I/O / step)
        vmem_limit = 96 << 20
    else:                                # v7x: 64 MiB VMEM per TensorCore
        target_in_bytes = 2 << 20
        vmem_limit = 44 << 20

    if block_images is None:
        nb = max(1, target_in_bytes // (HW * itemsize))
        if nb < N:
            nb = max(8, (nb // 8) * 8)   # sublane-aligned blocks when tiling N
        nb = min(nb, N)
        # Megacore (v7x) + DMA/compute overlap: keep >= 2 grid steps when legal.
        if nb >= N and N >= 16:
            half = (((N + 1) // 2) // 8) * 8
            if half >= 8:
                nb = half
        # Prefer a block count that divides N: avoids a ragged (masked) last step.
        if 8 <= nb < N and N % 8 == 0 and N % nb != 0:
            for cand in range(nb, max(8, nb // 2) - 1, -8):
                if N % cand == 0:
                    nb = cand
                    break
        block_images = nb
    Nb = int(block_images)

    # Best-effort VMEM limit bump if the minimum legal block is large:
    # 2x-buffered input + 2x-buffered outputs + ~7 live whole-block temporaries.
    est = Nb * HW * (2 * itemsize + 4 * itemsize + 7 * compute_dtype.itemsize)
    vmem_limit = int(max(vmem_limit, min(vmem_cap - (16 << 20), int(est * 1.2))))

    xf = x.reshape(N, HW)                # free reshape: one lane-dense row / image
    grid = (pl.cdiv(N, Nb),)
    in_specs = [pl.BlockSpec((Nb, HW), lambda i: (i, 0))]

    if packed_out:
        out_shape = jax.ShapeDtypeStruct((N, 2 * HW), x.dtype)
        out_specs = pl.BlockSpec((Nb, 2 * HW), lambda i: (i, 0))
    else:
        out_shape = (jax.ShapeDtypeStruct((N, HW), x.dtype),
                     jax.ShapeDtypeStruct((N, HW), x.dtype))
        out_specs = (pl.BlockSpec((Nb, HW), lambda i: (i, 0)),
                     pl.BlockSpec((Nb, HW), lambda i: (i, 0)))

    kernel = functools.partial(_spatial_gradient_kernel, H=H, W=W,
                               compute_dtype=compute_dtype, packed_out=packed_out)

    out = pl.pallas_call(
        kernel,
        out_shape=out_shape,
        grid=grid,
        in_specs=in_specs,
        out_specs=out_specs,
        compiler_params=pltpu.CompilerParams(
            dimension_semantics=("parallel",),       # megacore split on v7x
            vmem_limit_bytes=vmem_limit,
        ),
        cost_estimate=pl.CostEstimate(
            flops=12 * N * HW,
            transcendentals=0,
            bytes_accessed=3 * N * HW * itemsize,    # read x, write gx + gy
        ),
    )(xf)

    if packed_out:
        # (B*C, [gx(HW) | gy(HW)]) -> (B, C, 2, H, W): free (contiguous) reshape.
        return out.reshape(B, C, 2, H, W)
    gx, gy = out
    # H*W not a multiple of 128: the kernel emits two lane-dense, unmasked
    # outputs; XLA stacks them here (one extra copy) instead of the kernel
    # paying misaligned/masked stores on every tile.
    return jnp.stack([gx, gy], axis=1).reshape(B, C, 2, H, W)


# ------------------------------- reference ------------------------------------


def _spatial_gradient_reference(x: jax.Array) -> jax.Array:
    """Pure-JAX reference (same math as the PyTorch module, f32 accumulation)."""
    H, W = x.shape[2], x.shape[3]
    xp = jnp.pad(x.astype(jnp.float32), ((0, 0), (0, 0), (1, 1), (1, 1)), mode="edge")
    s = lambda dh, dw: xp[:, :, dh:dh + H, dw:dw + W]
    gx = (s(0, 2) - s(0, 0)) + 2.0 * (s(1, 2) - s(1, 0)) + (s(2, 2) - s(2, 0))
    gy = (s(2, 0) - s(0, 0)) + 2.0 * (s(2, 1) - s(0, 1)) + (s(2, 2) - s(0, 2))
    return jnp.stack([gx, gy], axis=2)


if __name__ == "__main__":
    root = jax.random.PRNGKey(0)
    k0, k1 = jax.random.split(root)

    # 1) f32, H*W multiple of 128 -> packed lane-aligned [gx|gy] output path.
    x = jax.random.uniform(k0, (2, 4, 16, 16), dtype=jnp.float32)
    out = jax.block_until_ready(spatial_gradient(x))
    ref = _spatial_gradient_reference(x)
    assert out.shape == (2, 4, 2, 16, 16), out.shape
    assert jnp.allclose(out, ref, atol=1e-5, rtol=1e-5), "f32 aligned mismatch"

    # 2) f32, H*W not a multiple of 128 -> two lane-dense outputs, stacked outside.
    x2 = jax.random.uniform(k1, (1, 3, 12, 12), dtype=jnp.float32)
    out2 = jax.block_until_ready(spatial_gradient(x2))
    ref2 = _spatial_gradient_reference(x2)
    assert out2.shape == (1, 3, 2, 12, 12), out2.shape
    assert jnp.allclose(out2, ref2, atol=1e-5, rtol=1e-5), "f32 unaligned mismatch"

    # 3) bf16 I/O (bf16 compute on v6e/v7x, f32 compute on older chips).
    xb = x.astype(jnp.bfloat16)
    outb = jax.block_until_ready(spatial_gradient(xb))
    refb = _spatial_gradient_reference(xb)
    assert outb.dtype == jnp.bfloat16 and outb.shape == (2, 4, 2, 16, 16)
    assert jnp.allclose(outb.astype(jnp.float32), refb, atol=1.5e-1), "bf16 mismatch"

    print("KERNEL_OK")
</pallas_src>

<mosaic_0001>
module attributes {stable_mosaic.version = 11 : i64} {
  func.func @_spatial_gradient_kernel(%arg0: i32, %arg1: memref<8x256xf32, #tpu.memory_space<vmem>>, %arg2: memref<8x512xf32, #tpu.memory_space<vmem>>) attributes {dimension_semantics = [#tpu.dimension_semantics<parallel>], iteration_bounds = array<i64: 1>, scalar_prefetch = 0 : i64, scratch_operands = 0 : i64, tpu.core_type = #tpu.core_type<tc>, window_params = [{transform_indices = @transform_0, window_bounds = array<i64: 8, 256>}, {transform_indices = @transform_1, window_bounds = array<i64: 8, 512>}]} {
    %c0 = arith.constant 0 : index
    %c0_0 = arith.constant 0 : index
    %0 = vector.load %arg1[%c0, %c0_0] : memref<8x256xf32, #tpu.memory_space<vmem>>, vector<8x256xf32>
    %1 = tpu.iota {dimensions = array<i32: 1>} : vector<1x256xi32>
    %c16_i32 = arith.constant 16 : i32
    %c0_i32 = arith.constant 0 : i32
    %2 = arith.cmpi eq, %c16_i32, %c0_i32 : i32
    %c1_i32 = arith.constant 1 : i32
    %3 = arith.select %2, %c1_i32, %c16_i32 : i32
    %4 = vector.broadcast %3 : i32 to vector<1x256xi32>
    %5 = arith.remsi %1, %4 : vector<1x256xi32>
    %c0_i32_1 = arith.constant 0 : i32
    %6 = vector.broadcast %c0_i32_1 : i32 to vector<1x256xi32>
    %7 = arith.cmpi ne, %5, %6 : vector<1x256xi32>
    %c0_i32_2 = arith.constant 0 : i32
    %8 = vector.broadcast %c0_i32_2 : i32 to vector<1x256xi32>
    %9 = arith.cmpi slt, %5, %8 : vector<1x256xi32>
    %c0_i32_3 = arith.constant 0 : i32
    %10 = arith.cmpi slt, %3, %c0_i32_3 : i32
    %11 = vector.broadcast %10 : i1 to vector<1x256xi1>
    %12 = vector.broadcast %11 : vector<1x256xi1> to vector<1x256xi1>
    %13 = arith.xori %9, %12 : vector<1x256xi1>
    %14 = arith.andi %13, %7 : vector<1x256xi1>
    %15 = vector.broadcast %3 : i32 to vector<1x256xi32>
    %16 = arith.addi %5, %15 : vector<1x256xi32>
    %17 = arith.select %14, %16, %5 : vector<1x256xi1>, vector<1x256xi32>
    %c16_i32_4 = arith.constant 16 : i32
    %18 = vector.broadcast %c16_i32_4 : i32 to vector<1x256xi32>
    %19 = arith.cmpi slt, %1, %18 : vector<1x256xi32>
    %c240_i32 = arith.constant 240 : i32
    %20 = vector.broadcast %c240_i32 : i32 to vector<1x256xi32>
    %21 = arith.cmpi sge, %1, %20 : vector<1x256xi32>
    %c0_i32_5 = arith.constant 0 : i32
    %22 = vector.broadcast %c0_i32_5 : i32 to vector<1x256xi32>
    %23 = arith.cmpi eq, %17, %22 : vector<1x256xi32>
    %c15_i32 = arith.constant 15 : i32
    %24 = vector.broadcast %c15_i32 : i32 to vector<1x256xi32>
    %25 = arith.cmpi eq, %17, %24 : vector<1x256xi32>
    %c16_i32_6 = arith.constant 16 : i32
    %26 = tpu.dynamic_rotate %0 by %c16_i32_6 dim 1 : vector<8x256xf32>, i32 -> vector<8x256xf32>
    %27 = vector.shape_cast %19 : vector<1x256xi1> to vector<1x256xi1>
    %28 = vector.broadcast %27 : vector<1x256xi1> to vector<8x256xi1>
    %29 = arith.select %28, %0, %26 : vector<8x256xi1>, vector<8x256xf32>
    %c240_i32_7 = arith.constant 240 : i32
    %30 = tpu.dynamic_rotate %0 by %c240_i32_7 dim 1 : vector<8x256xf32>, i32 -> vector<8x256xf32>
    %31 = vector.shape_cast %21 : vector<1x256xi1> to vector<1x256xi1>
    %32 = vector.broadcast %31 : vector<1x256xi1> to vector<8x256xi1>
    %33 = arith.select %32, %0, %30 : vector<8x256xi1>, vector<8x256xf32>
    %cst = arith.constant 2.000000e+00 : f32
    %34 = vector.broadcast %cst : f32 to vector<8x256xf32>
    %35 = arith.mulf %34, %0 : vector<8x256xf32>
    %36 = arith.addf %29, %35 : vector<8x256xf32>
    %37 = arith.addf %36, %33 : vector<8x256xf32>
    %38 = arith.subf %33, %29 : vector<8x256xf32>
    %c1_i32_8 = arith.constant 1 : i32
    %39 = tpu.dynamic_rotate %37 by %c1_i32_8 dim 1 : vector<8x256xf32>, i32 -> vector<8x256xf32>
    %40 = vector.shape_cast %23 : vector<1x256xi1> to vector<1x256xi1>
    %41 = vector.broadcast %40 : vector<1x256xi1> to vector<8x256xi1>
    %42 = arith.select %41, %37, %39 : vector<8x256xi1>, vector<8x256xf32>
    %c255_i32 = arith.constant 255 : i32
    %43 = tpu.dynamic_rotate %37 by %c255_i32 dim 1 : vector<8x256xf32>, i32 -> vector<8x256xf32>
    %44 = vector.shape_cast %25 : vector<1x256xi1> to vector<1x256xi1>
    %45 = vector.broadcast %44 : vector<1x256xi1> to vector<8x256xi1>
    %46 = arith.select %45, %37, %43 : vector<8x256xi1>, vector<8x256xf32>
    %c1_i32_9 = arith.constant 1 : i32
    %47 = tpu.dynamic_rotate %38 by %c1_i32_9 dim 1 : vector<8x256xf32>, i32 -> vector<8x256xf32>
    %48 = vector.shape_cast %23 : vector<1x256xi1> to vector<1x256xi1>
    %49 = vector.broadcast %48 : vector<1x256xi1> to vector<8x256xi1>
    %50 = arith.select %49, %38, %47 : vector<8x256xi1>, vector<8x256xf32>
    %c255_i32_10 = arith.constant 255 : i32
    %51 = tpu.dynamic_rotate %38 by %c255_i32_10 dim 1 : vector<8x256xf32>, i32 -> vector<8x256xf32>
    %52 = vector.shape_cast %25 : vector<1x256xi1> to vector<1x256xi1>
    %53 = vector.broadcast %52 : vector<1x256xi1> to vector<8x256xi1>
    %54 = arith.select %53, %38, %51 : vector<8x256xi1>, vector<8x256xf32>
    %55 = arith.subf %46, %42 : vector<8x256xf32>
    %cst_11 = arith.constant 2.000000e+00 : f32
    %56 = vector.broadcast %cst_11 : f32 to vector<8x256xf32>
    %57 = arith.mulf %56, %38 : vector<8x256xf32>
    %58 = arith.addf %50, %57 : vector<8x256xf32>
    %59 = arith.addf %58, %54 : vector<8x256xf32>
    %c0_12 = arith.constant 0 : index
    %c0_13 = arith.constant 0 : index
    %60 = vector.load %arg2[%c0_12, %c0_13] : memref<8x512xf32, #tpu.memory_space<vmem>>, vector<8x256xf32>
    tpu.vector_store %arg2[%c0_12, %c0_13], %55 {strides = array<i32>} : memref<8x512xf32, #tpu.memory_space<vmem>>, vector<8x256xf32>,
    %c0_14 = arith.constant 0 : index
    %c256 = arith.constant 256 : index
    %61 = vector.load %arg2[%c0_14, %c256] : memref<8x512xf32, #tpu.memory_space<vmem>>, vector<8x256xf32>
    tpu.vector_store %arg2[%c0_14, %c256], %59 {strides = array<i32>} : memref<8x512xf32, #tpu.memory_space<vmem>>, vector<8x256xf32>,
    return
  }
  func.func @transform_0(%arg0: i32) -> (i32, i32) {
    %c0_i32 = arith.constant 0 : i32
    %c0_i32_0 = arith.constant 0 : i32
    return %arg0, %c0_i32 : i32, i32
  }
  func.func @transform_1(%arg0: i32) -> (i32, i32) {
    %c0_i32 = arith.constant 0 : i32
    %c0_i32_0 = arith.constant 0 : i32
    return %arg0, %c0_i32 : i32, i32
  }
}

</mosaic_0001>

<llo_original>
// kernel: tpu_custom_call.1
$region0: #{tpu_custom_call.1}
  #allocation0 [shape = 'u32[]', space=smem, size = 0x4, offset = 0x4, fixed_abs, tag = 'smem constant byte address 0x4 - core index']
  #allocation1 [shape = 'u32[72,128]{1,0:T(1,128)}', space=vmem, size = 0x9000, scoped, tag = 'internal scratch']
  %s0 = inlined_call_operand.hbm [shape: f32[8,256], index: 0, kind: input, shape index: {}]
  %s1 = inlined_call_operand.hbm [shape: f32[8,512], index: 1, kind: output, shape index: {}]
  %s2 = sld [smem:[#allocation0]]
  $region18: #{tpu_custom_call.1} parent=0
    _
  %s4 = ssub.s32 1, %s2
  %s5 = scalar_select 0, %s4, %s2
  $region1: #{tpu_custom_call.1} parent=0
    #allocation2 [shape = 'u8[8192]{0}', space=vmem, size = 0x2000, scoped, tag = 'input window, operand 0, single buffered']
    #allocation3 [shape = 's32[1]{0}', space=sflag, size = 0x4, scoped, tag = 'scoped memory for tpu_custom_call.1']
    #allocation4 [shape = 's32[1]{0}', space=sflag, size = 0x4, scoped, tag = 'scoped memory for tpu_custom_call.1']
    #allocation5 [shape = 'u8[16384]{0}', space=vmem, size = 0x4000, scoped, tag = 'output window, operand 0, single buffered']
    %6 = vsyncpa [#allocation3], 0
    %7 = vsyncpa [#allocation4], 0
    // Predicated region
    $region2: #{tpu_custom_call.1} parent=1 // pred_check
      _
    $region3: #{tpu_custom_call.1} parent=1 // pred_check_branch
      %9 = sbr.rel (0) target = $region5
    $region4: #{tpu_custom_call.1} parent=1 // pred_region
      %11 = vsyncadd [#allocation3], 0
      %s13 = sshll.u32 %s0, 4
      %s14 = int_to_ptr.hbm [resolvable:$true] %s13
      %s15 = sshll.u32 [#allocation2], 4
      %s16 = int_to_ptr.vmem [resolvable:$true] %s15
      %18 = dma.hbm_to_vmem [thread:$0]  %s14, 256, %s16, [#allocation3]
    $region5: #{tpu_custom_call.1} parent=1 // pred_fallthru
      _
    // Predicated region
    $region6: #{tpu_custom_call.1} parent=1 // pred_check
      _
    $region7: #{tpu_custom_call.1} parent=1 // pred_check_branch
      %20 = sbr.rel (0) target = $region9
    $region8: #{tpu_custom_call.1} parent=1 // pred_region
      %22 = dma.done [#allocation3], 256
    $region9: #{tpu_custom_call.1} parent=1 // pred_fallthru
      _
    %v23 = vld [vmem:[#allocation2] sm:$0xff]
    %v24 = vld [vmem:[#allocation2 + $0x8] sm:$0xff]
    %v25 = vlaneseq
    %v26 = vand.u32 %v25, 127
    %v27 = vadd.s32 %v26, 128
    %vm28 = vcmp.lt.s32.totalorder %v26, 0
    %v29 = vsub.s32 0, %v26
    %v30 = vsel %vm28, %v29, %v26
    %v31 = vshrl.u32 %v30, 4
    %v32 = vand.u32 %v30, 15
    %v33 = vsub.s32 0, %v32
    %v34 = vsel %vm28, %v33, %v32
    %vm35 = vcmp.lt.s32.totalorder %v27, 0
    %v36 = vsub.s32 0, %v27
    %v37 = vsel %vm35, %v36, %v27
    %v38 = vshrl.u32 %v37, 4
    %v39 = vand.u32 %v37, 15
    %v40 = vsub.s32 0, %v39
    %v41 = vsel %vm35, %v40, %v39
    %vm42 = vcmp.ne.s32.totalorder %v34, 0
    %vm43 = vcmp.ne.s32.totalorder %v41, 0
    %vm44 = vcmp.lt.s32.totalorder %v34, 0
    %vm45 = vcmp.lt.s32.totalorder %v41, 0
    %vm46 = vmand %vm44, %vm42
    %vm47 = vmand %vm45, %vm43
    %v48 = vadd.s32 %v34, 16
    %v49 = vadd.s32 %v41, 16
    %v50 = vsel %vm46, %v48, %v34
    %v51 = vsel %vm47, %v49, %v41
    %vm52 = vcmp.lt.s32.totalorder %v26, 16
    %vm53 = vcmp.lt.s32.totalorder %v27, 16
    %vm54 = vcmp.ge.s32.totalorder %v26, 240
    %vm55 = vcmp.ge.s32.totalorder %v27, 240
    %vm56 = vcmp.eq.s32.totalorder %v50, 0
    %vm57 = vcmp.eq.s32.totalorder %v51, 0
    %vm58 = vcmp.eq.s32.totalorder %v50, 15
    %vm59 = vcmp.eq.s32.totalorder %v51, 15
    %60 = vrot.lane.b32.xlu0 %v23, 16
    %v61 = vpop.permute.xlu0 %60
    %62 = vrot.lane.b32.xlu0 %v24, 16
    %v63 = vpop.permute.xlu0 %62
    %v64 = vsel %vm52, %v61, %v63
    %v65 = vsel %vm52, %v63, %v61
    %v66 = vsel %vm52, 1, 0
    %v67 = vsel %vm53, 1, 0
    %vm68 = vcmp.eq.s32.totalorder %v66, 1
    %vm69 = vcmp.eq.s32.totalorder %v67, 1
    %v70 = vsel %vm68, %v23, %v65
    %v71 = vsel %vm69, %v24, %v64
    %72 = vrot.lane.b32.xlu0 %v23, 112
    %v73 = vpop.permute.xlu0 %72
    %74 = vrot.lane.b32.xlu0 %v24, 112
    %v75 = vpop.permute.xlu0 %74
    %vm76 = vcmp.lt.s32.totalorder %v26, 112
    %v77 = vsel %vm76, %v73, %v75
    %v78 = vsel %vm76, %v75, %v73
    %v79 = vsel %vm54, 1, 0
    %v80 = vsel %vm55, 1, 0
    %vm81 = vcmp.eq.s32.totalorder %v79, 1
    %vm82 = vcmp.eq.s32.totalorder %v80, 1
    %v83 = vsel %vm81, %v23, %v77
    %v84 = vsel %vm82, %v24, %v78
    %v85 = vmul.f32 %v23, 2.0
    %v86 = vmul.f32 %v24, 2.0
    %v87 = vadd.f32 %v70, %v85
    %v88 = vadd.f32 %v71, %v86
    %v89 = vadd.f32 %v87, %v83
    %v90 = vadd.f32 %v88, %v84
    %v91 = vsub.f32 %v83, %v70
    %v92 = vsub.f32 %v84, %v71
    %93 = vrot.lane.b32.xlu0 %v89, 1
    %v94 = vpop.permute.xlu0 %93
    %95 = vrot.lane.b32.xlu0 %v90, 1
    %v96 = vpop.permute.xlu0 %95
    %vm97 = vcmp.lt.s32.totalorder %v26, 1
    %v98 = vsel %vm97, %v94, %v96
    %v99 = vsel %vm97, %v96, %v94
    %v100 = vsel %vm56, 1, 0
    %v101 = vsel %vm57, 1, 0
    %vm102 = vcmp.eq.s32.totalorder %v100, 1
    %vm103 = vcmp.eq.s32.totalorder %v101, 1
    %v104 = vsel %vm102, %v89, %v99
    %v105 = vsel %vm103, %v90, %v98
    %106 = vrot.lane.b32.xlu0 %v89, 127
    %v107 = vpop.permute.xlu0 %106
    %108 = vrot.lane.b32.xlu0 %v90, 127
    %v109 = vpop.permute.xlu0 %108
    %vm110 = vcmp.lt.s32.totalorder %v26, 127
    %v111 = vsel %vm110, %v107, %v109
    %v112 = vsel %vm110, %v109, %v107
    %v113 = vsel %vm58, 1, 0
    %v114 = vsel %vm59, 1, 0
    %vm115 = vcmp.eq.s32.totalorder %v113, 1
    %vm116 = vcmp.eq.s32.totalorder %v114, 1
    %v117 = vsel %vm115, %v89, %v111
    %v118 = vsel %vm116, %v90, %v112
    %119 = vrot.lane.b32.xlu0 %v91, 1
    %v120 = vpop.permute.xlu0 %119
    %121 = vrot.lane.b32.xlu0 %v92, 1
    %v122 = vpop.permute.xlu0 %121
    %v123 = vsel %vm97, %v120, %v122
    %v124 = vsel %vm97, %v122, %v120
    %v125 = vsel %vm102, %v91, %v124
    %v126 = vsel %vm103, %v92, %v123
    %127 = vrot.lane.b32.xlu0 %v91, 127
    %v128 = vpop.permute.xlu0 %127
    %129 = vrot.lane.b32.xlu0 %v92, 127
    %v130 = vpop.permute.xlu0 %129
    %v131 = vsel %vm110, %v128, %v130
    %v132 = vsel %vm110, %v130, %v128
    %v133 = vsel %vm115, %v91, %v131
    %v134 = vsel %vm116, %v92, %v132
    %v135 = vsub.f32 %v117, %v104
    %v136 = vsub.f32 %v118, %v105
    %v137 = vmul.f32 %v91, 2.0
    %v138 = vmul.f32 %v92, 2.0
    %v139 = vadd.f32 %v125, %v137
    %v140 = vadd.f32 %v126, %v138
    %v141 = vadd.f32 %v139, %v133
    %v142 = vadd.f32 %v140, %v134
    %143 = vst [vmem:[#allocation5] sm:$0xff] %v135
    %144 = vst [vmem:[#allocation5 + $0x8] sm:$0xff] %v136
    %145 = vst [vmem:[#allocation5 + $0x10] sm:$0xff] %v141
    %146 = vst [vmem:[#allocation5 + $0x18] sm:$0xff] %v142
    // Predicated region
    $region10: #{tpu_custom_call.1} parent=1 // pred_check
      _
    $region11: #{tpu_custom_call.1} parent=1 // pred_check_branch
      %148 = sbr.rel (0) target = $region13
    $region12: #{tpu_custom_call.1} parent=1 // pred_region
      %150 = vsyncadd [#allocation4], 0
      %s152 = sshll.u32 [#allocation5], 4
      %s153 = int_to_ptr.vmem [resolvable:$true] %s152
      %s154 = sshll.u32 %s1, 4
      %s155 = int_to_ptr.hbm [resolvable:$true] %s154
      %157 = dma.vmem_to_hbm [thread:$0]  %s153, 512, %s155, [#allocation4]
    $region13: #{tpu_custom_call.1} parent=1 // pred_fallthru
      _
    // Predicated region
    $region14: #{tpu_custom_call.1} parent=1 // pred_check
      _
    $region15: #{tpu_custom_call.1} parent=1 // pred_check_branch
      %159 = sbr.rel (0) target = $region17
    $region16: #{tpu_custom_call.1} parent=1 // pred_region
      %161 = dma.done [#allocation4], 512
    $region17: #{tpu_custom_call.1} parent=1 // pred_fallthru
      _
    %162 = vsyncpa [#allocation3], 1
    %163 = vsyncpa [#allocation4], 1

</llo_original>
